<compile_context>
chip_gen: v7x
topology: tpu7x:2x2x1
jax: 0.10.0
libtpu: 0.0.40
codegen_flags: <defaults>
</compile_context>

<pallas_src>
import itertools
from typing import NamedTuple

import numpy as np
import jax
import jax.numpy as jnp
from jax.experimental import pallas as pl
from jax.experimental.pallas import tpu as pltpu


# ---------------------------------------------------------------------------
# Init-time (module __init__) setup, plain JAX "glue".
# ---------------------------------------------------------------------------
def compute_partial_repr(input_points, control_points):
    """U(r) = 0.5 * r^2 * log(r^2), with NaN (r==0) filled with 0."""
    N = input_points.shape[0]
    M = control_points.shape[0]
    diff = input_points.reshape(N, 1, 2) - control_points.reshape(1, M, 2)
    dist = (diff * diff).sum(axis=-1)
    rep = 0.5 * dist * jnp.log(dist)
    return jnp.where(jnp.isnan(rep), 0.0, rep)


class TPSBuffers(NamedTuple):
    m_t: jax.Array                    # (N, HW_pad) fused & transposed TPS matrix
    inverse_kernel: jax.Array         # (N+3, N+3)   (reference / unfused)
    target_coordinate_repr: jax.Array  # (HW, N+3)   (reference / unfused)
    hw: int
    tile_hw: int
    n_tiles: int


def build_tps_buffers(target_height, target_width, target_control_points,
                      max_tile_hw=24576, m_dtype=jnp.float32):
    """Builds fused TPS buffers and picks the HW tiling."""
    tcp = target_control_points.astype(jnp.float32)
    N = tcp.shape[0]

    fk = jnp.zeros((N + 3, N + 3), dtype=jnp.float32)
    fk = fk.at[:N, :N].set(compute_partial_repr(tcp, tcp))
    fk = fk.at[:N, N].set(1.0)          # column -3
    fk = fk.at[N, :N].set(1.0)          # row -3
    fk = fk.at[:N, N + 1:].set(tcp)     # last two columns
    fk = fk.at[N + 1:, :N].set(tcp.T)   # last two rows
    inverse_kernel = jnp.linalg.inv(fk)

    H, W = target_height, target_width
    HW = H * W
    yy, xx = jnp.meshgrid(jnp.arange(H, dtype=jnp.float32),
                          jnp.arange(W, dtype=jnp.float32), indexing="ij")
    Y = yy.reshape(HW, 1) * 2.0 / (H - 1) - 1.0
    X = xx.reshape(HW, 1) * 2.0 / (W - 1) - 1.0
    target_coordinate = jnp.concatenate([X, Y], axis=1)                 # (HW, 2)

    tc_partial = compute_partial_repr(target_coordinate, tcp)           # (HW, N)
    target_coordinate_repr = jnp.concatenate(
        [tc_partial, jnp.ones((HW, 1), jnp.float32), target_coordinate], axis=1
    )                                                                   # (HW, N+3)

    # ---- Fuse the two forward matmuls at init time ------------------------
    # out_b = repr @ (inv @ [scp_b; 0]) = (repr @ inv)[:, :N] @ scp_b
    fused = jnp.dot(target_coordinate_repr, inverse_kernel,
                    preferred_element_type=jnp.float32)[:, :N]          # (HW, N)
    m_t = fused.T                                                       # (N, HW)

    # ---- HW tiling: large tiles, even count >= 2, minimal lane padding ----
    chunks = -(-HW // 128)                       # HW in 128-lane chunks
    max_chunks = max(1, max_tile_hw // 128)
    n_tiles = max(2, -(-chunks // max_chunks))   # >= 2 tiles (v7x: 2 TensorCores)
    if n_tiles % 2:
        n_tiles += 1                             # even count -> balanced megacore split
    chunks_per_tile = -(-chunks // n_tiles)
    tile_hw = chunks_per_tile * 128
    hw_pad = n_tiles * tile_hw                   # padding <= (n_tiles)*128 lanes
    if hw_pad != HW:
        m_t = jnp.pad(m_t, ((0, 0), (0, hw_pad - HW)))
    m_t = m_t.astype(m_dtype)

    return TPSBuffers(m_t, inverse_kernel, target_coordinate_repr,
                      HW, tile_hw, n_tiles)


# ---------------------------------------------------------------------------
# Pallas kernel: single fused, batch-collapsed, lane-dense matmul.
# ---------------------------------------------------------------------------
def _tps_fused_kernel(y_ref, m_ref, out_ref):
    # y_ref   : (rows_pad, N)        batch-collapsed, transposed source control pts
    # m_ref   : (N, TILE_HW)         fused+transposed TPS matrix tile (f32 or bf16)
    # out_ref : (rows_pad, TILE_HW)  transposed source coordinates (lane dim = HW)
    m = m_ref[...].astype(jnp.float32)           # cheap VPU cast; HBM stream stays narrow
    out_ref[...] = jnp.dot(y_ref[...], m, preferred_element_type=jnp.float32)


def tps_grid_gen_forward(source_control_points, tps: TPSBuffers):
    """source_control_points: (B, N, 2) -> lane-dense grid (B, 2, HW).

    Row [b, 0, :] is X, row [b, 1, :] is Y.  Use grid_to_bhw2() (off the hot
    path) if the original-module (B, HW, 2) layout is required downstream.
    """
    B, N, two = source_control_points.shape
    assert two == 2 and tps.m_t.shape[0] == N
    hw_pad = tps.m_t.shape[1]
    tile_hw, n_tiles, hw = tps.tile_hw, tps.n_tiles, tps.hw
    assert hw_pad == n_tiles * tile_hw

    rows = 2 * B
    rows_pad = -(-rows // 8) * 8                 # full sublanes -> unmasked vst

    # (B, N, 2) -> (B, 2, N) -> (2B, N); zero-pad rows to a multiple of 8.
    y_t = jnp.transpose(source_control_points.astype(jnp.float32),
                        (0, 2, 1)).reshape(rows, N)
    if rows_pad != rows:
        y_t = jnp.pad(y_t, ((0, rows_pad - rows), (0, 0)))

    m_itemsize = jnp.dtype(tps.m_t.dtype).itemsize
    # Double-buffered VMEM footprint estimate (25 -> 32 sublane padding on m_t).
    m_blk = 32 * tile_hw * m_itemsize
    out_blk = rows_pad * tile_hw * 4
    y_blk = rows_pad * max(N, 128) * 4
    vmem_needed = 2 * (m_blk + out_blk + y_blk)
    vmem_limit = int(min(64 << 20, max(2 * vmem_needed, 16 << 20)))

    cost = pl.CostEstimate(
        flops=2 * rows_pad * N * hw_pad,
        transcendentals=0,
        bytes_accessed=(tps.m_t.size * m_itemsize
                        + y_t.size * 4
                        + rows_pad * hw_pad * 4),
    )

    out_t = pl.pallas_call(
        _tps_fused_kernel,
        out_shape=jax.ShapeDtypeStruct((rows_pad, hw_pad), jnp.float32),
        grid_spec=pl.GridSpec(
            grid=(n_tiles,),
            in_specs=[
                pl.BlockSpec((rows_pad, N), lambda h: (0, 0)),
                pl.BlockSpec((N, tile_hw), lambda h: (0, h)),
            ],
            out_specs=pl.BlockSpec((rows_pad, tile_hw), lambda h: (0, h)),
        ),
        compiler_params=pltpu.CompilerParams(
            dimension_semantics=("parallel",),
            vmem_limit_bytes=vmem_limit),
        cost_estimate=cost,
    )(y_t, tps.m_t)

    # Slice off row/lane padding; keep lane-dense (B, 2, HW) layout (no transpose).
    return out_t[:rows, :hw].reshape(B, 2, hw)


def grid_to_bhw2(grid_b2hw):
    """(B, 2, HW) lane-dense layout -> (B, HW, 2) (original module layout).

    Off the hot path; prefer consuming the lane-dense layout directly (or fuse
    the interleave into the downstream grid_sample kernel)."""
    return jnp.transpose(grid_b2hw, (0, 2, 1))


# ---------------------------------------------------------------------------
# Demo / smoke test (small shapes; control grid built exactly like STNNet's 5x5)
# ---------------------------------------------------------------------------
if __name__ == "__main__":
    # Small demo image (the module uses 256x192); HW stays a clean lane count.
    target_height = 16
    target_width = 24
    B = 2
    HW = target_height * target_width

    # Target control points: 5x5 grid over [-0.9, 0.9], (Y, X) product then swap
    # to (X, Y), exactly as in STNNet.__init__.
    r1 = r2 = 0.9
    grid_h = grid_w = 5
    ys = np.arange(-r1, r1 + 1e-05, 2.0 * r1 / (grid_h - 1))
    xs = np.arange(-r2, r2 + 1e-05, 2.0 * r2 / (grid_w - 1))
    yx = np.array(list(itertools.product(ys, xs)), dtype=np.float32)  # (25,2)=(Y,X)
    target_control_points = jnp.asarray(np.stack([yx[:, 1], yx[:, 0]], axis=1))
    N = target_control_points.shape[0]

    tps_f32 = build_tps_buffers(target_height, target_width, target_control_points,
                                max_tile_hw=24576, m_dtype=jnp.float32)

    # Example batched source control points (perturbed target points), as the
    # localization net (tanh-bounded) would produce.
    key = jax.random.PRNGKey(0)
    source_control_points = (
        target_control_points[None, :, :]
        + 0.1 * jax.random.normal(key, (B, N, 2), dtype=jnp.float32))

    out = jax.block_until_ready(tps_grid_gen_forward(source_control_points, tps_f32))

    # Pure-JAX reference: the original (unfused) two-matmul chain.
    y_ref = jnp.concatenate(
        [source_control_points, jnp.zeros((B, 3, 2), jnp.float32)], axis=1)
    mapping_ref = jnp.einsum("ij,bjk->bik", tps_f32.inverse_kernel, y_ref)
    ref_bhw2 = jnp.einsum("hj,bjk->bhk", tps_f32.target_coordinate_repr, mapping_ref)
    ref = jnp.transpose(ref_bhw2, (0, 2, 1))            # (B, 2, HW) lane-dense layout

    assert out.shape == (B, 2, HW)
    assert jnp.allclose(out, ref, atol=1e-3, rtol=1e-3), (
        float(jnp.max(jnp.abs(out - ref))))
    assert grid_to_bhw2(out).shape == (B, HW, 2)        # original-module layout

    # Optional bf16 m_t storage (halves the dominant HBM stream); the grid error
    # must stay well under one pixel pitch 2/(W-1) to be usable for warping.
    tps_bf16 = build_tps_buffers(target_height, target_width, target_control_points,
                                 max_tile_hw=24576, m_dtype=jnp.bfloat16)
    out_bf16 = jax.block_until_ready(
        tps_grid_gen_forward(source_control_points, tps_bf16))
    pixel_pitch = 2.0 / (target_width - 1)
    assert float(jnp.max(jnp.abs(out_bf16 - ref))) < pixel_pitch

    print("KERNEL_OK")
</pallas_src>

<mosaic_0001>
module attributes {stable_mosaic.version = 11 : i64} {
  func.func @_tps_fused_kernel(%arg0: i32, %arg1: memref<8x25xf32, #tpu.memory_space<vmem>>, %arg2: memref<25x256xf32, #tpu.memory_space<vmem>>, %arg3: memref<8x256xf32, #tpu.memory_space<vmem>>) attributes {dimension_semantics = [#tpu.dimension_semantics<parallel>], iteration_bounds = array<i64: 2>, scalar_prefetch = 0 : i64, scratch_operands = 0 : i64, tpu.core_type = #tpu.core_type<tc>, window_params = [{pipeline_mode = #tpu.pipeline_mode<synchronous>, transform_indices = @transform_0, window_bounds = array<i64: 8, 25>}, {transform_indices = @transform_1, window_bounds = array<i64: 25, 256>}, {transform_indices = @transform_2, window_bounds = array<i64: 8, 256>}]} {
    %c0 = arith.constant 0 : index
    %c0_0 = arith.constant 0 : index
    %0 = vector.load %arg2[%c0, %c0_0] : memref<25x256xf32, #tpu.memory_space<vmem>>, vector<25x256xf32>
    %c0_1 = arith.constant 0 : index
    %c0_2 = arith.constant 0 : index
    %1 = vector.load %arg1[%c0_1, %c0_2] : memref<8x25xf32, #tpu.memory_space<vmem>>, vector<8x25xf32>
    %cst = arith.constant dense<0.000000e+00> : vector<8x256xf32>
    %2 = tpu.matmul %1, %0, %cst {dimension_numbers = #tpu.dot_dimension_numbers<[1], [0], [0], [1], [0, 0, 1, 1], [], []>} : vector<8x25xf32>, vector<25x256xf32>, vector<8x256xf32> -> vector<8x256xf32>
    %c0_3 = arith.constant 0 : index
    %c0_4 = arith.constant 0 : index
    %3 = vector.load %arg3[%c0_3, %c0_4] : memref<8x256xf32, #tpu.memory_space<vmem>>, vector<8x256xf32>
    tpu.vector_store %arg3[%c0_3, %c0_4], %2 {strides = array<i32>} : memref<8x256xf32, #tpu.memory_space<vmem>>, vector<8x256xf32>,
    return
  }
  func.func @transform_0(%arg0: i32) -> (i32, i32) {
    %c0_i32 = arith.constant 0 : i32
    %c0_i32_0 = arith.constant 0 : i32
    %c0_i32_1 = arith.constant 0 : i32
    return %c0_i32, %c0_i32_0 : i32, i32
  }
  func.func @transform_1(%arg0: i32) -> (i32, i32) {
    %c0_i32 = arith.constant 0 : i32
    %c0_i32_0 = arith.constant 0 : i32
    return %c0_i32, %arg0 : i32, i32
  }
  func.func @transform_2(%arg0: i32) -> (i32, i32) {
    %c0_i32 = arith.constant 0 : i32
    %c0_i32_0 = arith.constant 0 : i32
    return %c0_i32, %arg0 : i32, i32
  }
}

</mosaic_0001>

<llo_original>
// kernel: tpu_custom_call.1
$region0: #{tpu_custom_call.1}
  #allocation0 [shape = 'u32[]', space=smem, size = 0x4, offset = 0x4, fixed_abs, tag = 'smem constant byte address 0x4 - core index']
  #allocation1 [shape = 'u32[144,128]{1,0:T(1,128)}', space=vmem, size = 0x12000, scoped, tag = 'internal scratch']
  %s0 = inlined_call_operand.hbm [shape: f32[8,25], index: 0, kind: input, shape index: {}]
  %s1 = inlined_call_operand.hbm [shape: f32[25,512], index: 1, kind: input, shape index: {}]
  %s2 = inlined_call_operand.hbm [shape: f32[8,512], index: 2, kind: output, shape index: {}]
  %s3 = sld [smem:[#allocation0]]
  $region49: #{tpu_custom_call.1} parent=0
    _
  %s5 = ssub.s32 1, %s3
  %s6 = scalar_select 0, %s5, %s3
  $region1: #{tpu_custom_call.1} parent=0
    #allocation2 [shape = 'u8[4096]{0}', space=vmem, size = 0x1000, scoped, tag = 'input window, operand 0, single buffered']
    #allocation3 [shape = 's32[2]{0}', space=sflag, size = 0x8, scoped, tag = 'scoped memory for tpu_custom_call.1']
    #allocation4 [shape = 's32[2]{0}', space=sflag, size = 0x8, scoped, tag = 'scoped memory for tpu_custom_call.1']
    #allocation5 [shape = 'u8[65536]{0}', space=vmem, size = 0x10000, scoped, tag = 'input window, operand 1']
    #allocation6 [shape = 's32[2]{0}', space=sflag, size = 0x8, scoped, tag = 'scoped memory for tpu_custom_call.1']
    #allocation7 [shape = 'u8[16384]{0}', space=vmem, size = 0x4000, scoped, tag = 'output window, operand 0']
    %7 = vsyncpa [#allocation3], 0
    %8 = vsyncpa [#allocation6], 0
    %s9 = scalar_lea.sflag [#allocation6], 1
    %10 = vsyncpa %s9, 0
    %11 = vsyncpa [#allocation4], 0
    %s12 = scalar_lea.sflag [#allocation4], 1
    %13 = vsyncpa %s12, 0
    loop: start=0, step=1, limit=4
    $region2: #{tpu_custom_call.1} parent=1 // loop_pre_header
      _
    $region3: #{tpu_custom_call.1} parent=1 // loop_header
      %s15 = sphi 0, %s19
      %p16 = scmp.ge.s32.totalorder %s15, 4
      %s23 = sphi 0, %s23
      %s25 = sphi 0, %s23
      %s26 = sphi 0, %s25
      %s40 = sphi 0, %s26
      %s46 = sphi 0, %s48
      %s49 = sphi 0, %s46
      %s50 = sphi 0, %s49
      %s66 = sphi 0, %s50
      %s72 = sphi 0, %s74
      %s75 = sphi 0, %s72
      %s76 = sphi 0, %s75
      %s92 = sphi 0, %s76
    $region4: #{tpu_custom_call.1} parent=1 // loop_header_branch
      %18 = sbr.rel (%p16) target = $region8
    $region5: #{tpu_custom_call.1} parent=1 // loop_body
      %s20 = ssub.s32 %s15, 1
      %s21 = ssub.s32 %s15, 2
      %s22 = sadd.s32 %s15, 1
      %s24 = sadd.s32 %s23, 1
      %p27 = scmp.eq.s32.totalorder %s15, 1
      %p28 = scmp.ne.s32.totalorder %s23, %s25
      %p29 = scmp.eq.s32.totalorder %s15, 0
      %p30 = por %p28, %p29
      %p31 = scmp.ne.s32.totalorder %s23, %s25
      %p32 = scmp.eq.s32.totalorder %s20, 1
      %p33 = por %p31, %p32
      %p34 = scmp.ne.s32.totalorder %s25, %s26
      %p35 = scmp.eq.s32.totalorder %s20, 0
      %p36 = por %p34, %p35
      %p37 = scmp.ne.s32.totalorder %s25, %s26
      %p38 = scmp.eq.s32.totalorder %s21, 1
      %p39 = por %p37, %p38
      %p41 = scmp.ne.s32.totalorder %s26, %s40
      %p42 = scmp.eq.s32.totalorder %s21, 0
      %p43 = por %p41, %p42
      %s44 = ssub.s32 %s15, %s22
      %p45 = scmp.eq.s32.totalorder %s44, 0
      %s47 = sadd.s32 %s46, 1
      %s48 = scalar_select %p45, %s46, %s47
      %p51 = pneg %p45
      %p52 = scmp.eq.s32.totalorder %s15, 1
      %p53 = por %p51, %p52
      %p54 = scmp.ne.s32.totalorder %s46, %s49
      %p55 = scmp.eq.s32.totalorder %s15, 0
      %p56 = por %p54, %p55
      %p57 = scmp.ne.s32.totalorder %s46, %s49
      %p58 = scmp.eq.s32.totalorder %s20, 1
      %p59 = por %p57, %p58
      %p60 = scmp.ne.s32.totalorder %s49, %s50
      %p61 = scmp.eq.s32.totalorder %s20, 0
      %p62 = por %p60, %p61
      %p63 = scmp.ne.s32.totalorder %s49, %s50
      %p64 = scmp.eq.s32.totalorder %s21, 1
      %p65 = por %p63, %p64
      %p67 = scmp.ne.s32.totalorder %s50, %s66
      %p68 = scmp.eq.s32.totalorder %s21, 0
      %p69 = por %p67, %p68
      %s70 = ssub.s32 %s15, %s22
      %p71 = scmp.eq.s32.totalorder %s70, 0
      %s73 = sadd.s32 %s72, 1
      %s74 = scalar_select %p71, %s72, %s73
      %p77 = pneg %p71
      %p78 = scmp.eq.s32.totalorder %s15, 1
      %p79 = por %p77, %p78
      %p80 = scmp.ne.s32.totalorder %s72, %s75
      %p81 = scmp.eq.s32.totalorder %s15, 0
      %p82 = por %p80, %p81
      %p83 = scmp.ne.s32.totalorder %s72, %s75
      %p84 = scmp.eq.s32.totalorder %s20, 1
      %p85 = por %p83, %p84
      %p86 = scmp.ne.s32.totalorder %s75, %s76
      %p87 = scmp.eq.s32.totalorder %s20, 0
      %p88 = por %p86, %p87
      %p89 = scmp.ne.s32.totalorder %s75, %s76
      %p90 = scmp.eq.s32.totalorder %s21, 1
      %p91 = por %p89, %p90
      %p93 = scmp.ne.s32.totalorder %s76, %s92
      %p94 = scmp.eq.s32.totalorder %s21, 0
      %p95 = por %p93, %p94
      %p96 = scmp.le.s32.totalorder 1, %s15
      %p97 = scmp.lt.s32.totalorder %s15, 3
      %p98 = pnand %p96, %p97
      %p99 = pneg %p98
      // Predicated region
      $region9: #{tpu_custom_call.1} parent=5 // pred_check
        _
      $region10: #{tpu_custom_call.1} parent=5 // pred_check_branch
        %101 = sbr.rel (%p98) target = $region12
      $region11: #{tpu_custom_call.1} parent=5 // pred_region
        %s102 = ssub.s32 %s15, 1
        // Predicated region
        $region13: #{tpu_custom_call.1} parent=11 // pred_check
          %p103 = pneg %p36
        $region14: #{tpu_custom_call.1} parent=11 // pred_check_branch
          %105 = sbr.rel (%p103) target = $region16
        $region15: #{tpu_custom_call.1} parent=11 // pred_region
          %s107 = ssub.s32 128, 128
          %108 = vsyncadd [#allocation3], %s107
          %s110 = sshll.u32 [#allocation2], 4
          %s111 = int_to_ptr.vmem [resolvable:$true] %s110
          %113 = dma.hbm_to_vmem [thread:$0]  %s0, 128, %s111, [#allocation3]
        $region16: #{tpu_custom_call.1} parent=11 // pred_fallthru
          _
      $region12: #{tpu_custom_call.1} parent=5 // pred_fallthru
        _
      %p114 = scmp.lt.s32.totalorder %s15, 2
      // Predicated region
      $region17: #{tpu_custom_call.1} parent=5 // pred_check
        %p115 = pneg %p114
      $region18: #{tpu_custom_call.1} parent=5 // pred_check_branch
        %117 = sbr.rel (%p115) target = $region20
      $region19: #{tpu_custom_call.1} parent=5 // pred_region
        // Predicated region
        $region21: #{tpu_custom_call.1} parent=19 // pred_check
          %p118 = pneg %p56
        $region22: #{tpu_custom_call.1} parent=19 // pred_check_branch
          %120 = sbr.rel (%p118) target = $region24
        $region23: #{tpu_custom_call.1} parent=19 // pred_region
          %s121 = sand.u32 %s46, 1
          %s122 = scalar_lea.sflag [#allocation6], %s121
          %s123 = sand.u32 %s46, 1
          %s124 = smul.addr %s123, 64
          %s125 = scalar_lea.vmem [#allocation5], %s124
          %s126 = smul.u32 2, %s15
          %s128 = ssub.s32 1024, 1024
          %129 = vsyncadd %s122, %s128
          %s130 = smul.addr %s126, 128
          %s131 = scalar_lea.hbm %s1, %s130
          %s132 = sshll.u32 %s125, 4
          %s133 = int_to_ptr.vmem [resolvable:$true] %s132
          %138 = dma.hbm_to_vmem [thread:$0]  %s131, 1024, %s133, %s122, 512, 256, 16
        $region24: #{tpu_custom_call.1} parent=19 // pred_fallthru
          _
      $region20: #{tpu_custom_call.1} parent=5 // pred_fallthru
        _
      %p139 = scmp.le.s32.totalorder 1, %s15
      %p140 = scmp.lt.s32.totalorder %s15, 3
      %p141 = pnand %p139, %p140
      %p142 = pneg %p141
      // Predicated region
      $region25: #{tpu_custom_call.1} parent=5 // pred_check
        _
      $region26: #{tpu_custom_call.1} parent=5 // pred_check_branch
        %144 = sbr.rel (%p141) target = $region28
      $region27: #{tpu_custom_call.1} parent=5 // pred_region
        %s145 = ssub.s32 %s15, 1
        // Predicated region
        $region29: #{tpu_custom_call.1} parent=27 // pred_check
          %p146 = pneg %p36
        $region30: #{tpu_custom_call.1} parent=27 // pred_check_branch
          %148 = sbr.rel (%p146) target = $region32
        $region31: #{tpu_custom_call.1} parent=27 // pred_region
          %149 = dma.done [#allocation3], 128
        $region32: #{tpu_custom_call.1} parent=27 // pred_fallthru
          _
        %s150 = sand.u32 %s49, 1
        %s151 = scalar_lea.sflag [#allocation6], %s150
        %s152 = sand.u32 %s49, 1
        %s153 = smul.addr %s152, 64
        %s154 = scalar_lea.vmem [#allocation5], %s153
        // Predicated region
        $region33: #{tpu_custom_call.1} parent=27 // pred_check
          %p155 = pneg %p62
        $region34: #{tpu_custom_call.1} parent=27 // pred_check_branch
          %157 = sbr.rel (%p155) target = $region36
        $region35: #{tpu_custom_call.1} parent=27 // pred_region
          %158 = dma.done %s151, 1024
        $region36: #{tpu_custom_call.1} parent=27 // pred_fallthru
          _
        %p159 = pneg %p36
        %p160 = pneg %p33
        %s161 = sand.u32 %s49, 1
        %s162 = scalar_lea.sflag [#allocation6], %s161
        %s163 = sand.u32 %s49, 1
        %s164 = smul.addr %s163, 64
        %s165 = scalar_lea.vmem [#allocation5], %s164
        %p166 = pneg %p62
        %p167 = pneg %p59
        %p168 = pneg %p88
        %p169 = pneg %p85
        %s170 = sand.u32 %s75, 1
        %s171 = scalar_lea.sflag [#allocation4], %s170
        %s172 = sand.u32 %s75, 1
        %s173 = smul.addr %s172, 16
        %s174 = scalar_lea.vmem [#allocation7], %s173
        %s175 = smul.u32 2, %s20
        %s176 = smul.u32 2, %s20
        %v177 = vld [vmem:[%s154] sm:$0xff]
        %v178 = vld [vmem:[%s154 + $0x8] sm:$0xff]
        %v179 = vld [vmem:[%s154 + $0x10] sm:$0xff]
        %v180 = vld [vmem:[%s154 + $0x18] sm:$0xff]
        %v181 = vld [vmem:[%s154 + $0x20] sm:$0xff]
        %v182 = vld [vmem:[%s154 + $0x28] sm:$0xff]
        %v183 = vld [vmem:[%s154 + $0x30] sm:$0x1]
        %v184 = vld [vmem:[%s154 + $0x38] sm:$0x1]
        %v185 = vld [vmem:[#allocation2] sm:$0xff]
        %vm186 = vcmask 203776
        %v188 = vsel %vm186, %v185, 0
        %vm190 = vcmask 1040384
        %v192 = vsel %vm190, %v183, 0
        %v195 = vsel %vm190, %v184, 0
        %197 = vmatprep.subr.mxu0 %v178
        %198 = vmatpush1.msra.mxu0 %v177
        %199 = vmatprep.subr.mxu0 %v180
        %200 = vmatpush1.msra.mxu0 %v179
        %201 = vmatprep.subr.mxu0 %v182
        %202 = vmatpush1.msra.mxu0 %v181
        %203 = vmatprep.subr.mxu0 %v195
        %204 = vmatpush1.msra.mxu0 %v192
        %205 = vmatprep.subr.mxu0 0.0
        %206 = vmatpush1.msra.mxu0 0.0
        %207 = vmatprep.subr.mxu0 0.0
        %208 = vmatpush1.msra.mxu0 0.0
        %209 = vmatprep.subr.mxu0 0.0
        %210 = vmatpush1.msra.mxu0 0.0
        %211 = vmatprep.subr.mxu0 0.0
        %212 = vmatpush1.msra.mxu0 0.0
        %213 = vmatprep.subr.mxu0 0.0
        %214 = vmatpush1.msra.mxu0 0.0
        %215 = vmatprep.subr.mxu0 0.0
        %216 = vmatpush1.msra.mxu0 0.0
        %217 = vmatprep.subr.mxu0 0.0
        %218 = vmatpush1.msra.mxu0 0.0
        %219 = vmatprep.subr.mxu0 0.0
        %220 = vmatpush1.msra.mxu0 0.0
        %221 = vmatprep.subr.mxu0 0.0
        %222 = vmatpush1.msra.mxu0 0.0
        %223 = vmatprep.subr.mxu0 0.0
        %224 = vmatpush1.msra.mxu0 0.0
        %225 = vmatprep.subr.mxu0 0.0
        %226 = vmatpush1.msra.mxu0 0.0
        %227 = vmatprep.subr.mxu0 0.0
        %228 = vmatpush1.msra.mxu0 0.0
        %229 = vmatprep.subr.mxu0 0.0
        %230 = vmatpush1.msra.mxu0 0.0
        %231 = vmatprep.subr.mxu0 0.0
        %232 = vmatpush1.msra.mxu0 0.0
        %233 = vmatprep.subr.mxu0 0.0
        %234 = vmatpush1.msra.mxu0 0.0
        %235 = vmatprep.subr.mxu0 0.0
        %236 = vmatpush1.msra.mxu0 0.0
        %237 = vmatprep.subr.mxu0 0.0
        %238 = vmatpush1.msra.mxu0 0.0
        %239 = vmatprep.subr.mxu0 0.0
        %240 = vmatpush1.msra.mxu0 0.0
        %241 = vmatprep.subr.mxu0 0.0
        %242 = vmatpush1.msra.mxu0 0.0
        %243 = vmatprep.subr.mxu0 0.0
        %244 = vmatpush1.msra.mxu0 0.0
        %245 = vmatprep.subr.mxu0 0.0
        %246 = vmatpush1.msra.mxu0 0.0
        %247 = vmatprep.subr.mxu0 0.0
        %248 = vmatpush1.msra.mxu0 0.0
        %249 = vmatprep.subr.mxu0 0.0
        %250 = vmatpush1.msra.mxu0 0.0
        %251 = vmatprep.subr.mxu0 0.0
        %252 = vmatpush1.msra.mxu0 0.0
        %253 = vmatprep.subr.mxu0 0.0
        %254 = vmatpush1.msra.mxu0 0.0
        %255 = vmatprep.subr.mxu0 0.0
        %256 = vmatpush1.msra.mxu0 0.0
        %257 = vmatprep.subr.mxu0 0.0
        %258 = vmatpush1.msra.mxu0 0.0
        %259 = vmatprep.subr.mxu0 0.0
        %260 = vmatpush1.msra.mxu0 0.0
        %261 = vmatprep.mubr.f32.mxu0 0.0
        %262 = vmatmul.mubr.f32.gmra.mrb[0].mxu0 %v188
        %v263 = vpop.f32.mrb[0].mxu0
        %v264 = vadd.f32 0.0, %v263
        %v265 = vpop.f32.mrb[0].mxu0
        %v266 = vadd.f32 0.0, %v265
        %267 = vdwg.mxu0
        %268 = vst [vmem:[%s174] sm:$0xff] %v264
        %269 = vst [vmem:[%s174 + $0x8] sm:$0xff] %v266
        %s270 = sand.u32 %s75, 1
        %s271 = scalar_lea.sflag [#allocation4], %s270
        %s272 = sand.u32 %s75, 1
        %s273 = smul.addr %s272, 16
        %s274 = scalar_lea.vmem [#allocation7], %s273
        // Predicated region
        $region37: #{tpu_custom_call.1} parent=27 // pred_check
          %p275 = pneg %p85
        $region38: #{tpu_custom_call.1} parent=27 // pred_check_branch
          %277 = sbr.rel (%p275) target = $region40
        $region39: #{tpu_custom_call.1} parent=27 // pred_region
          %s278 = smul.u32 2, %s20
          %s280 = ssub.s32 256, 256
          %281 = vsyncadd %s271, %s280
          %s282 = smul.addr %s278, 128
          %s283 = scalar_lea.hbm %s2, %s282
          %s285 = sshll.u32 %s274, 4
          %s286 = int_to_ptr.vmem [resolvable:$true] %s285
          %288 = dma.vmem_to_hbm [thread:$0]  %s286, 256, %s283, %s271
        $region40: #{tpu_custom_call.1} parent=27 // pred_fallthru
          _
      $region28: #{tpu_custom_call.1} parent=5 // pred_fallthru
        _
      %p289 = scmp.le.s32.totalorder 2, %s15
      // Predicated region
      $region41: #{tpu_custom_call.1} parent=5 // pred_check
        %p290 = pneg %p289
      $region42: #{tpu_custom_call.1} parent=5 // pred_check_branch
        %292 = sbr.rel (%p290) target = $region44
      $region43: #{tpu_custom_call.1} parent=5 // pred_region
        %s293 = ssub.s32 %s15, 2
        // Predicated region
        $region45: #{tpu_custom_call.1} parent=43 // pred_check
          %p294 = pneg %p91
        $region46: #{tpu_custom_call.1} parent=43 // pred_check_branch
          %296 = sbr.rel (%p294) target = $region48
        $region47: #{tpu_custom_call.1} parent=43 // pred_region
          %s297 = sand.u32 %s76, 1
          %s298 = scalar_lea.sflag [#allocation4], %s297
          %s299 = sand.u32 %s76, 1
          %s300 = smul.addr %s299, 16
          %s301 = scalar_lea.vmem [#allocation7], %s300
          %302 = dma.done %s298, 256
        $region48: #{tpu_custom_call.1} parent=43 // pred_fallthru
          _
      $region44: #{tpu_custom_call.1} parent=5 // pred_fallthru
        _
    $region6: #{tpu_custom_call.1} parent=1 // loop_footer
      %s19 = sadd.s32 1, %s15
    $region7: #{tpu_custom_call.1} parent=1 // loop_footer_branch
      %14 = sbr.rel target = $region3
    $region8: #{tpu_custom_call.1} parent=1 // loop_exit
      _
    %303 = vsyncpa [#allocation3], 1
    %s304 = scalar_lea.sflag [#allocation3], 1
    %305 = vsyncpa %s304, 1
    %306 = vsyncpa [#allocation6], 1
    %s307 = scalar_lea.sflag [#allocation6], 1
    %308 = vsyncpa %s307, 1
    %309 = vsyncpa [#allocation4], 1
    %s310 = scalar_lea.sflag [#allocation4], 1
    %311 = vsyncpa %s310, 1

</llo_original>
